<compile_context>
chip_gen: v7x
topology: tpu7x:2x2x1
jax: 0.10.0
libtpu: 0.0.40
codegen_flags: <defaults>
</compile_context>

<pallas_src>
import jax
import jax.numpy as jnp
from jax.experimental import pallas as pl
from jax.experimental.pallas import tpu as pltpu


def attention_kernel(x_ref, w_ref, pooled_ref, attn_ref):
    """One batch tile: x_ref (TB, L, H), w_ref (1, H) -> pooled (TB, H), attn (TB, L)."""
    x = x_ref[...]                                   # (TB, L, H), storage dtype
    w = w_ref[...].astype(jnp.float32)               # (1, H)

    # scores[b, l] = sum_h x[b, l, h] * w[h]  (== torch.bmm(inputs, W^T).squeeze(-1))
    # Multiply promotes to f32 -> f32 accumulation without a full-tile upcast copy.
    scores = jnp.sum(x * w[None, :, :], axis=-1)     # (TB, L) f32

    # relu, then a single fused softmax normalization over the sequence axis.
    scores = jnp.maximum(scores, 0.0)
    m = jnp.max(scores, axis=-1, keepdims=True)
    e = jnp.exp(scores - m)
    denom = jnp.sum(e, axis=-1, keepdims=True)
    # Exact reciprocal keeps 1e-5 parity with the reference; approx=True would
    # move this onto the EUP slot but is only ~bf16 accurate.
    attn = e * pl.reciprocal(denom, approx=False)    # (TB, L) f32

    # Weighted sum over the sequence axis -> (TB, H), f32 accumulation.
    pooled = jnp.sum(x * attn[..., None], axis=1)

    pooled_ref[...] = pooled.astype(pooled_ref.dtype)
    attn_ref[...] = attn.astype(attn_ref.dtype)


def _pick_block_batch(B, L, H, dtype, vmem_budget_bytes=10 * 1024 * 1024):
    """Largest batch tile whose working set stays inside a conservative VMEM budget."""
    itemsize = jnp.dtype(dtype).itemsize
    # Per batch row resident in VMEM:
    #   2x double-buffered input row (storage dtype)
    #   + ~2 row-sized f32 temporaries from the multiply/reduce in the kernel
    #   + f32 attn/pooled rows and double-buffered output rows (small)
    per_row = L * H * (2 * itemsize + 2 * 4) + 4 * (L + H) * 3
    tb = max(1, vmem_budget_bytes // per_row)
    if tb >= B:
        return B
    return max(8, (tb // 8) * 8)


def attention_forward(inputs, att_weights, *, block_batch=None):
    """inputs: (B, L, H), att_weights: (1, H). Returns (pooled (B, H), attn (B, L))."""
    B, L, H = inputs.shape
    if block_batch is None:
        block_batch = _pick_block_batch(B, L, H, inputs.dtype)
    tb = min(int(block_batch), B)
    if tb < B:
        # Second-minor dim of the (TB, H)/(TB, L) output blocks must be 8-aligned
        # unless it equals the full batch dim.
        tb = max(8, (tb // 8) * 8)
    grid = (pl.cdiv(B, tb),)

    pooled, attn = pl.pallas_call(
        attention_kernel,
        out_shape=(
            jax.ShapeDtypeStruct((B, H), inputs.dtype),
            jax.ShapeDtypeStruct((B, L), inputs.dtype),
        ),
        grid=grid,
        in_specs=[
            pl.BlockSpec((tb, L, H), lambda b: (b, 0, 0)),
            pl.BlockSpec((1, H), lambda b: (0, 0)),   # weights stay resident across tiles
        ],
        out_specs=(
            pl.BlockSpec((tb, H), lambda b: (b, 0)),
            pl.BlockSpec((tb, L), lambda b: (b, 0)),
        ),
        compiler_params=pltpu.CompilerParams(
            dimension_semantics=("parallel",),        # megacore split on v7x; no-op on v5e/v6e
            vmem_limit_bytes=32 * 1024 * 1024,        # safe on v7x's 64 MiB physical VMEM
        ),
    )(inputs, att_weights)
    return pooled, attn


def _reference(inputs, att_weights):
    # Pure-JAX reference (mirrors the PyTorch forward, including the no-op renorm).
    scores = jnp.einsum("blh,h->bl", inputs, att_weights[0])
    scores = jnp.maximum(scores, 0.0)
    attn = jax.nn.softmax(scores, axis=-1)
    attn = attn / jnp.sum(attn, axis=-1, keepdims=True)
    pooled = jnp.sum(inputs * attn[..., None], axis=1)
    return pooled, attn


if __name__ == "__main__":
    B, L, H = 16, 8, 32  # batch, seq_len, hidden_size (small demo shapes)

    key = jax.random.PRNGKey(0)
    k_in, k_w = jax.random.split(key)

    # Deterministic parameter init, matching nn.init.uniform_(-stdv, stdv)
    stdv = 1.0 / jnp.sqrt(jnp.float32(H))
    att_weights = jax.random.uniform(k_w, (1, H), jnp.float32, minval=-stdv, maxval=stdv)
    inputs = jax.random.normal(k_in, (B, L, H), jnp.float32)

    # block_batch=8 forces a 2-step batch grid so the tiled/pipelined path is
    # exercised even at demo scale (the auto heuristic would pick TB=B here).
    pooled, attn = attention_forward(inputs, att_weights, block_batch=8)
    jax.block_until_ready((pooled, attn))

    ref_pooled, ref_attn = _reference(inputs, att_weights)
    assert pooled.shape == (B, H) and attn.shape == (B, L)
    assert jnp.allclose(pooled, ref_pooled, atol=1e-5, rtol=1e-5)
    assert jnp.allclose(attn, ref_attn, atol=1e-5, rtol=1e-5)

    print("KERNEL_OK")
</pallas_src>

<mosaic_0001>
module attributes {stable_mosaic.version = 11 : i64} {
  func.func @attention_kernel(%arg0: i32, %arg1: memref<8x8x32xf32, #tpu.memory_space<vmem>>, %arg2: memref<1x32xf32, #tpu.memory_space<vmem>>, %arg3: memref<8x32xf32, #tpu.memory_space<vmem>>, %arg4: memref<8x8xf32, #tpu.memory_space<vmem>>) attributes {dimension_semantics = [#tpu.dimension_semantics<parallel>], iteration_bounds = array<i64: 2>, scalar_prefetch = 0 : i64, scratch_operands = 0 : i64, tpu.core_type = #tpu.core_type<tc>, window_params = [{transform_indices = @transform_0, window_bounds = array<i64: 8, 8, 32>}, {pipeline_mode = #tpu.pipeline_mode<synchronous>, transform_indices = @transform_1, window_bounds = array<i64: 1, 32>}, {transform_indices = @transform_2, window_bounds = array<i64: 8, 32>}, {transform_indices = @transform_3, window_bounds = array<i64: 8, 8>}]} {
    %c0 = arith.constant 0 : index
    %c0_0 = arith.constant 0 : index
    %c0_1 = arith.constant 0 : index
    %0 = vector.load %arg1[%c0, %c0_0, %c0_1] : memref<8x8x32xf32, #tpu.memory_space<vmem>>, vector<8x8x32xf32>
    %c0_2 = arith.constant 0 : index
    %c0_3 = arith.constant 0 : index
    %1 = vector.load %arg2[%c0_2, %c0_3] : memref<1x32xf32, #tpu.memory_space<vmem>>, vector<1x32xf32>
    %2 = vector.shape_cast %1 : vector<1x32xf32> to vector<1x1x32xf32>
    %3 = vector.broadcast %2 : vector<1x1x32xf32> to vector<8x8x32xf32>
    %4 = arith.mulf %0, %3 : vector<8x8x32xf32>
    %cst = arith.constant dense<0.000000e+00> : vector<8x8xf32>
    %5 = vector.multi_reduction <add>, %4, %cst [2] : vector<8x8x32xf32> to vector<8x8xf32>
    %cst_4 = arith.constant 0.000000e+00 : f32
    %6 = vector.broadcast %cst_4 : f32 to vector<8x8xf32>
    %7 = arith.maximumf %5, %6 : vector<8x8xf32>
    %cst_5 = arith.constant dense<0xFF800000> : vector<8xf32>
    %8 = vector.multi_reduction <maximumf>, %7, %cst_5 [1] : vector<8x8xf32> to vector<8xf32>
    %9 = vector.shape_cast %8 : vector<8xf32> to vector<8x1xf32>
    %10 = vector.broadcast %9 : vector<8x1xf32> to vector<8x8xf32>
    %11 = arith.subf %7, %10 : vector<8x8xf32>
    %12 = math.exp %11 : vector<8x8xf32>
    %cst_6 = arith.constant dense<0.000000e+00> : vector<8xf32>
    %13 = vector.multi_reduction <add>, %12, %cst_6 [1] : vector<8x8xf32> to vector<8xf32>
    %14 = vector.shape_cast %13 : vector<8xf32> to vector<8x1xf32>
    %15 = tpu.reciprocal %14 : vector<8x1xf32> -> vector<8x1xf32>
    %16 = vector.broadcast %15 : vector<8x1xf32> to vector<8x8xf32>
    %17 = arith.mulf %12, %16 : vector<8x8xf32>
    %18 = vector.shape_cast %17 : vector<8x8xf32> to vector<8x8x1xf32>
    %19 = vector.broadcast %18 : vector<8x8x1xf32> to vector<8x8x32xf32>
    %20 = arith.mulf %0, %19 : vector<8x8x32xf32>
    %cst_7 = arith.constant dense<0.000000e+00> : vector<8x32xf32>
    %21 = vector.multi_reduction <add>, %20, %cst_7 [1] : vector<8x8x32xf32> to vector<8x32xf32>
    %c0_8 = arith.constant 0 : index
    %c0_9 = arith.constant 0 : index
    %22 = vector.load %arg3[%c0_8, %c0_9] : memref<8x32xf32, #tpu.memory_space<vmem>>, vector<8x32xf32>
    tpu.vector_store %arg3[%c0_8, %c0_9], %21 {strides = array<i32>} : memref<8x32xf32, #tpu.memory_space<vmem>>, vector<8x32xf32>,
    %c0_10 = arith.constant 0 : index
    %c0_11 = arith.constant 0 : index
    %23 = vector.load %arg4[%c0_10, %c0_11] : memref<8x8xf32, #tpu.memory_space<vmem>>, vector<8x8xf32>
    tpu.vector_store %arg4[%c0_10, %c0_11], %17 {strides = array<i32>} : memref<8x8xf32, #tpu.memory_space<vmem>>, vector<8x8xf32>,
    return
  }
  func.func @transform_0(%arg0: i32) -> (i32, i32, i32) {
    %c0_i32 = arith.constant 0 : i32
    %c0_i32_0 = arith.constant 0 : i32
    %c0_i32_1 = arith.constant 0 : i32
    return %arg0, %c0_i32, %c0_i32_0 : i32, i32, i32
  }
  func.func @transform_1(%arg0: i32) -> (i32, i32) {
    %c0_i32 = arith.constant 0 : i32
    %c0_i32_0 = arith.constant 0 : i32
    %c0_i32_1 = arith.constant 0 : i32
    return %c0_i32, %c0_i32_0 : i32, i32
  }
  func.func @transform_2(%arg0: i32) -> (i32, i32) {
    %c0_i32 = arith.constant 0 : i32
    %c0_i32_0 = arith.constant 0 : i32
    return %arg0, %c0_i32 : i32, i32
  }
  func.func @transform_3(%arg0: i32) -> (i32, i32) {
    %c0_i32 = arith.constant 0 : i32
    %c0_i32_0 = arith.constant 0 : i32
    return %arg0, %c0_i32 : i32, i32
  }
}

</mosaic_0001>

<llo_original>
// kernel: tpu_custom_call.1
$region0: #{tpu_custom_call.1}
  #allocation0 [shape = 'u32[]', space=smem, size = 0x4, offset = 0x4, fixed_abs, tag = 'smem constant byte address 0x4 - core index']
  #allocation1 [shape = 'u32[144,128]{1,0:T(1,128)}', space=vmem, size = 0x12000, scoped, tag = 'internal scratch']
  %s0 = inlined_call_operand.hbm [shape: f32[16,8,32], index: 0, kind: input, shape index: {}]
  %s1 = inlined_call_operand.vmem [shape: f32[1,32], index: 1, kind: input, shape index: {}]
  %s2 = inlined_call_operand.hbm [shape: f32[16,32], index: 2, kind: output, shape index: {0}]
  %s3 = inlined_call_operand.vmem [shape: f32[16,8], index: 3, kind: output, shape index: {1}]
  %4 = xla_tuple %s2, %s3
  %s5 = sld [smem:[#allocation0]]
  $region53: #{tpu_custom_call.1} parent=0
    _
  %s7 = ssub.s32 1, %s5
  %s8 = scalar_select 0, %s7, %s5
  $region1: #{tpu_custom_call.1} parent=0
    #allocation2 [shape = 'u8[65536]{0}', space=vmem, size = 0x10000, scoped, tag = 'input window, operand 0']
    #allocation3 [shape = 's32[2]{0}', space=sflag, size = 0x8, scoped, tag = 'scoped memory for tpu_custom_call.1']
    #allocation4 [shape = 's32[2]{0}', space=sflag, size = 0x8, scoped, tag = 'scoped memory for tpu_custom_call.1']
    #allocation5 [shape = 'u8[8192]{0}', space=vmem, size = 0x2000, scoped, tag = 'output window, operand 0']
    %9 = vsyncpa [#allocation3], 0
    %s10 = scalar_lea.sflag [#allocation3], 1
    %11 = vsyncpa %s10, 0
    %12 = vsyncpa [#allocation4], 0
    %s13 = scalar_lea.sflag [#allocation4], 1
    %14 = vsyncpa %s13, 0
    loop: start=0, step=1, limit=4
    $region2: #{tpu_custom_call.1} parent=1 // loop_pre_header
      _
    $region3: #{tpu_custom_call.1} parent=1 // loop_header
      %s16 = sphi 0, %s20
      %p17 = scmp.ge.s32.totalorder %s16, 4
      %s26 = sphi 0, %s28
      %s29 = sphi 0, %s26
      %s30 = sphi 0, %s29
      %s46 = sphi 0, %s30
      %s50 = sphi 0, %s50
      %s52 = sphi 0, %s50
      %s53 = sphi 0, %s52
      %s67 = sphi 0, %s53
      %s73 = sphi 0, %s75
      %s76 = sphi 0, %s73
      %s77 = sphi 0, %s76
      %s93 = sphi 0, %s77
      %s99 = sphi 0, %s101
      %s102 = sphi 0, %s99
      %s103 = sphi 0, %s102
      %s119 = sphi 0, %s103
    $region4: #{tpu_custom_call.1} parent=1 // loop_header_branch
      %19 = sbr.rel (%p17) target = $region8
    $region5: #{tpu_custom_call.1} parent=1 // loop_body
      %s21 = ssub.s32 %s16, 1
      %s22 = ssub.s32 %s16, 2
      %s23 = sadd.s32 %s16, 1
      %s24 = ssub.s32 %s16, %s23
      %p25 = scmp.eq.s32.totalorder %s24, 0
      %s27 = sadd.s32 %s26, 1
      %s28 = scalar_select %p25, %s26, %s27
      %p31 = pneg %p25
      %p32 = scmp.eq.s32.totalorder %s16, 1
      %p33 = por %p31, %p32
      %p34 = scmp.ne.s32.totalorder %s26, %s29
      %p35 = scmp.eq.s32.totalorder %s16, 0
      %p36 = por %p34, %p35
      %p37 = scmp.ne.s32.totalorder %s26, %s29
      %p38 = scmp.eq.s32.totalorder %s21, 1
      %p39 = por %p37, %p38
      %p40 = scmp.ne.s32.totalorder %s29, %s30
      %p41 = scmp.eq.s32.totalorder %s21, 0
      %p42 = por %p40, %p41
      %p43 = scmp.ne.s32.totalorder %s29, %s30
      %p44 = scmp.eq.s32.totalorder %s22, 1
      %p45 = por %p43, %p44
      %p47 = scmp.ne.s32.totalorder %s30, %s46
      %p48 = scmp.eq.s32.totalorder %s22, 0
      %p49 = por %p47, %p48
      %s51 = sadd.s32 %s50, 1
      %p54 = scmp.eq.s32.totalorder %s16, 1
      %p55 = scmp.ne.s32.totalorder %s50, %s52
      %p56 = scmp.eq.s32.totalorder %s16, 0
      %p57 = por %p55, %p56
      %p58 = scmp.ne.s32.totalorder %s50, %s52
      %p59 = scmp.eq.s32.totalorder %s21, 1
      %p60 = por %p58, %p59
      %p61 = scmp.ne.s32.totalorder %s52, %s53
      %p62 = scmp.eq.s32.totalorder %s21, 0
      %p63 = por %p61, %p62
      %p64 = scmp.ne.s32.totalorder %s52, %s53
      %p65 = scmp.eq.s32.totalorder %s22, 1
      %p66 = por %p64, %p65
      %p68 = scmp.ne.s32.totalorder %s53, %s67
      %p69 = scmp.eq.s32.totalorder %s22, 0
      %p70 = por %p68, %p69
      %s71 = ssub.s32 %s16, %s23
      %p72 = scmp.eq.s32.totalorder %s71, 0
      %s74 = sadd.s32 %s73, 1
      %s75 = scalar_select %p72, %s73, %s74
      %p78 = pneg %p72
      %p79 = scmp.eq.s32.totalorder %s16, 1
      %p80 = por %p78, %p79
      %p81 = scmp.ne.s32.totalorder %s73, %s76
      %p82 = scmp.eq.s32.totalorder %s16, 0
      %p83 = por %p81, %p82
      %p84 = scmp.ne.s32.totalorder %s73, %s76
      %p85 = scmp.eq.s32.totalorder %s21, 1
      %p86 = por %p84, %p85
      %p87 = scmp.ne.s32.totalorder %s76, %s77
      %p88 = scmp.eq.s32.totalorder %s21, 0
      %p89 = por %p87, %p88
      %p90 = scmp.ne.s32.totalorder %s76, %s77
      %p91 = scmp.eq.s32.totalorder %s22, 1
      %p92 = por %p90, %p91
      %p94 = scmp.ne.s32.totalorder %s77, %s93
      %p95 = scmp.eq.s32.totalorder %s22, 0
      %p96 = por %p94, %p95
      %s97 = ssub.s32 %s16, %s23
      %p98 = scmp.eq.s32.totalorder %s97, 0
      %s100 = sadd.s32 %s99, 1
      %s101 = scalar_select %p98, %s99, %s100
      %p104 = pneg %p98
      %p105 = scmp.eq.s32.totalorder %s16, 1
      %p106 = por %p104, %p105
      %p107 = scmp.ne.s32.totalorder %s99, %s102
      %p108 = scmp.eq.s32.totalorder %s16, 0
      %p109 = por %p107, %p108
      %p110 = scmp.ne.s32.totalorder %s99, %s102
      %p111 = scmp.eq.s32.totalorder %s21, 1
      %p112 = por %p110, %p111
      %p113 = scmp.ne.s32.totalorder %s102, %s103
      %p114 = scmp.eq.s32.totalorder %s21, 0
      %p115 = por %p113, %p114
      %p116 = scmp.ne.s32.totalorder %s102, %s103
      %p117 = scmp.eq.s32.totalorder %s22, 1
      %p118 = por %p116, %p117
      %p120 = scmp.ne.s32.totalorder %s103, %s119
      %p121 = scmp.eq.s32.totalorder %s22, 0
      %p122 = por %p120, %p121
      %p123 = scmp.le.s32.totalorder 1, %s16
      %p124 = scmp.lt.s32.totalorder %s16, 3
      %p125 = pnand %p123, %p124
      %p126 = pneg %p125
      // Predicated region
      $region9: #{tpu_custom_call.1} parent=5 // pred_check
        _
      $region10: #{tpu_custom_call.1} parent=5 // pred_check_branch
        %128 = sbr.rel (%p125) target = $region12
      $region11: #{tpu_custom_call.1} parent=5 // pred_region
        %s129 = ssub.s32 %s16, 1
        // Predicated region
        $region13: #{tpu_custom_call.1} parent=11 // pred_check
          %p130 = pneg %p63
        $region14: #{tpu_custom_call.1} parent=11 // pred_check_branch
          %132 = sbr.rel (%p130) target = $region16
        $region15: #{tpu_custom_call.1} parent=11 // pred_region
          _
        $region16: #{tpu_custom_call.1} parent=11 // pred_fallthru
          _
      $region12: #{tpu_custom_call.1} parent=5 // pred_fallthru
        _
      %p133 = scmp.lt.s32.totalorder %s16, 2
      // Predicated region
      $region17: #{tpu_custom_call.1} parent=5 // pred_check
        %p134 = pneg %p133
      $region18: #{tpu_custom_call.1} parent=5 // pred_check_branch
        %136 = sbr.rel (%p134) target = $region20
      $region19: #{tpu_custom_call.1} parent=5 // pred_region
        // Predicated region
        $region21: #{tpu_custom_call.1} parent=19 // pred_check
          %p137 = pneg %p36
        $region22: #{tpu_custom_call.1} parent=19 // pred_check_branch
          %139 = sbr.rel (%p137) target = $region24
        $region23: #{tpu_custom_call.1} parent=19 // pred_region
          %s140 = sand.u32 %s26, 1
          %s141 = scalar_lea.sflag [#allocation3], %s140
          %s142 = sand.u32 %s26, 1
          %s143 = smul.addr %s142, 64
          %s144 = scalar_lea.vmem [#allocation2], %s143
          %s145 = smul.u32 8, %s16
          %s147 = ssub.s32 1024, 1024
          %148 = vsyncadd %s141, %s147
          %s149 = smul.addr %s145, 128
          %s150 = scalar_lea.hbm %s0, %s149
          %s151 = sshll.u32 %s144, 4
          %s152 = int_to_ptr.vmem [resolvable:$true] %s151
          %157 = dma.hbm_to_vmem [thread:$0]  %s150, 1024, %s152, %s141, 128, 128, 8
        $region24: #{tpu_custom_call.1} parent=19 // pred_fallthru
          _
      $region20: #{tpu_custom_call.1} parent=5 // pred_fallthru
        _
      %p158 = scmp.le.s32.totalorder 1, %s16
      %p159 = scmp.lt.s32.totalorder %s16, 3
      %p160 = pnand %p158, %p159
      %p161 = pneg %p160
      // Predicated region
      $region25: #{tpu_custom_call.1} parent=5 // pred_check
        _
      $region26: #{tpu_custom_call.1} parent=5 // pred_check_branch
        %163 = sbr.rel (%p160) target = $region28
      $region27: #{tpu_custom_call.1} parent=5 // pred_region
        %s164 = ssub.s32 %s16, 1
        %s165 = sand.u32 %s29, 1
        %s166 = scalar_lea.sflag [#allocation3], %s165
        %s167 = sand.u32 %s29, 1
        %s168 = smul.addr %s167, 64
        %s169 = scalar_lea.vmem [#allocation2], %s168
        // Predicated region
        $region29: #{tpu_custom_call.1} parent=27 // pred_check
          %p170 = pneg %p42
        $region30: #{tpu_custom_call.1} parent=27 // pred_check_branch
          %172 = sbr.rel (%p170) target = $region32
        $region31: #{tpu_custom_call.1} parent=27 // pred_region
          %173 = dma.done %s166, 1024
        $region32: #{tpu_custom_call.1} parent=27 // pred_fallthru
          _
        %s174 = sand.u32 %s29, 1
        %s175 = scalar_lea.sflag [#allocation3], %s174
        %s176 = sand.u32 %s29, 1
        %s177 = smul.addr %s176, 64
        %s178 = scalar_lea.vmem [#allocation2], %s177
        %p179 = pneg %p42
        %p180 = pneg %p39
        %p181 = pneg %p63
        %p182 = pneg %p60
        %p183 = pneg %p89
        %p184 = pneg %p86
        %s185 = sand.u32 %s76, 1
        %s186 = scalar_lea.sflag [#allocation4], %s185
        %s187 = sand.u32 %s76, 1
        %s188 = smul.addr %s187, 8
        %s189 = scalar_lea.vmem [#allocation5], %s188
        %p190 = pneg %p115
        %p191 = pneg %p112
        %p192 = scmp.lt.s32.totalorder %s21, 1
        %s193 = scalar_select %p192, %s21, 1
        %s194 = smul.addr %s193, 8
        %s195 = scalar_lea.vmem %s3, %s194
        %s196 = smul.u32 8, %s21
        %p197 = scmp.lt.s32.totalorder %s21, 1
        %s198 = scalar_select %p197, %s21, 1
        %s199 = smul.addr %s198, 8
        %s200 = scalar_lea.vmem %s3, %s199
        %v201 = vld [vmem:[%s169] sm:$0xff]
        %v202 = vld [vmem:[%s169 + $0x8] sm:$0xff]
        %v203 = vld [vmem:[%s169 + $0x10] sm:$0xff]
        %v204 = vld [vmem:[%s169 + $0x18] sm:$0xff]
        %v205 = vld [vmem:[%s169 + $0x20] sm:$0xff]
        %v206 = vld [vmem:[%s169 + $0x28] sm:$0xff]
        %v207 = vld [vmem:[%s169 + $0x30] sm:$0xff]
        %v208 = vld [vmem:[%s169 + $0x38] sm:$0xff]
        %v209 = vld [vmem:[%s1] sm:$0x1]
        %v211 = vlaneseq
        %v212 = vshrl.u32 %v211, 7
        %v213 = vsub.s32 0, %v212
        %v214 = vrot.slane %v209, %v213
        %v216 = vmul.f32 %v201, %v214
        %v217 = vmul.f32 %v202, %v214
        %v218 = vmul.f32 %v203, %v214
        %v219 = vmul.f32 %v204, %v214
        %v220 = vmul.f32 %v205, %v214
        %v221 = vmul.f32 %v206, %v214
        %v222 = vmul.f32 %v207, %v214
        %v223 = vmul.f32 %v208, %v214
        %vm224 = vcmask 261120
        %v225 = vsel %vm224, %v216, 0.0
        %226 = vadd.xlane.f32.xlu0 %v225
        %v227 = vpop.xlane.xlu0 %226
        %v228 = vsel %vm224, %v217, 0.0
        %229 = vadd.xlane.f32.xlu0 %v228
        %v230 = vpop.xlane.xlu0 %229
        %v231 = vsel %vm224, %v218, 0.0
        %232 = vadd.xlane.f32.xlu0 %v231
        %v233 = vpop.xlane.xlu0 %232
        %v234 = vsel %vm224, %v219, 0.0
        %235 = vadd.xlane.f32.xlu0 %v234
        %v236 = vpop.xlane.xlu0 %235
        %v237 = vsel %vm224, %v220, 0.0
        %238 = vadd.xlane.f32.xlu0 %v237
        %v239 = vpop.xlane.xlu0 %238
        %v240 = vsel %vm224, %v221, 0.0
        %241 = vadd.xlane.f32.xlu0 %v240
        %v242 = vpop.xlane.xlu0 %241
        %v243 = vsel %vm224, %v222, 0.0
        %244 = vadd.xlane.f32.xlu0 %v243
        %v245 = vpop.xlane.xlu0 %244
        %v246 = vsel %vm224, %v223, 0.0
        %247 = vadd.xlane.f32.xlu0 %v246
        %v248 = vpop.xlane.xlu0 %247
        %v249 = vmax.f32 %v227, 0.0
        %v250 = vmax.f32 %v230, 0.0
        %v251 = vmax.f32 %v233, 0.0
        %v252 = vmax.f32 %v236, 0.0
        %v253 = vmax.f32 %v239, 0.0
        %v254 = vmax.f32 %v242, 0.0
        %v255 = vmax.f32 %v245, 0.0
        %v256 = vmax.f32 %v248, 0.0
        %v265 = vlaneseq
        %v266 = vand.u32 %v265, 127
        %v267 = vlaneseq
        %v268 = vshrl.u32 %v267, 7
        %v269 = vsub.s32 %v266, %v268
        %v270 = vrot.slane %v249, %v269
        %v271 = vlaneseq
        %v272 = vshrl.u32 %v271, 7
        %v273 = vsub.s32 %v266, %v272
        %v274 = vrot.slane %v250, %v273
        %v275 = vlaneseq
        %v276 = vshrl.u32 %v275, 7
        %v277 = vsub.s32 %v266, %v276
        %v278 = vrot.slane %v251, %v277
        %v279 = vlaneseq
        %v280 = vshrl.u32 %v279, 7
        %v281 = vsub.s32 %v266, %v280
        %v282 = vrot.slane %v252, %v281
        %v283 = vlaneseq
        %v284 = vshrl.u32 %v283, 7
        %v285 = vsub.s32 %v266, %v284
        %v286 = vrot.slane %v253, %v285
        %v287 = vlaneseq
        %v288 = vshrl.u32 %v287, 7
        %v289 = vsub.s32 %v266, %v288
        %v290 = vrot.slane %v254, %v289
        %v291 = vlaneseq
        %v292 = vshrl.u32 %v291, 7
        %v293 = vsub.s32 %v266, %v292
        %v294 = vrot.slane %v255, %v293
        %v295 = vlaneseq
        %v296 = vshrl.u32 %v295, 7
        %v297 = vsub.s32 %v266, %v296
        %v298 = vrot.slane %v256, %v297
        %vm299 = vcmask 1041409
        %v300 = vsel %vm299, %v274, %v270
        %vm301 = vcmask 1042434
        %v302 = vsel %vm301, %v278, %v300
        %vm303 = vcmask 1043459
        %v304 = vsel %vm303, %v282, %v302
        %vm305 = vcmask 1044484
        %v306 = vsel %vm305, %v286, %v304
        %vm307 = vcmask 1045509
        %v308 = vsel %vm307, %v290, %v306
        %vm309 = vcmask 1046534
        %v310 = vsel %vm309, %v294, %v308
        %vm311 = vcmask 1047559
        %v312 = vsel %vm311, %v298, %v310
        %vm314 = vcmask 64512
        %v315 = vsel %vm314, %v312, -inf
        %316 = vmax.xlane.f32.xlu0 %v315
        %v317 = vpop.xlane.xlu0 %316
        %v319 = vlaneseq
        %v320 = vshrl.u32 %v319, 7
        %v321 = vsub.s32 0, %v320
        %v322 = vrot.slane %v317, %v321
        %v323 = vlaneseq
        %v324 = vshrl.u32 %v323, 7
        %v325 = vsub.s32 1, %v324
        %v326 = vrot.slane %v317, %v325
        %v327 = vlaneseq
        %v328 = vshrl.u32 %v327, 7
        %v329 = vsub.s32 2, %v328
        %v330 = vrot.slane %v317, %v329
        %v331 = vlaneseq
        %v332 = vshrl.u32 %v331, 7
        %v333 = vsub.s32 3, %v332
        %v334 = vrot.slane %v317, %v333
        %v335 = vlaneseq
        %v336 = vshrl.u32 %v335, 7
        %v337 = vsub.s32 4, %v336
        %v338 = vrot.slane %v317, %v337
        %v339 = vlaneseq
        %v340 = vshrl.u32 %v339, 7
        %v341 = vsub.s32 5, %v340
        %v342 = vrot.slane %v317, %v341
        %v343 = vlaneseq
        %v344 = vshrl.u32 %v343, 7
        %v345 = vsub.s32 6, %v344
        %v346 = vrot.slane %v317, %v345
        %v347 = vlaneseq
        %v348 = vshrl.u32 %v347, 7
        %v349 = vsub.s32 7, %v348
        %v350 = vrot.slane %v317, %v349
        %v359 = vsub.f32 %v249, %v322
        %v360 = vsub.f32 %v250, %v326
        %v361 = vsub.f32 %v251, %v330
        %v362 = vsub.f32 %v252, %v334
        %v363 = vsub.f32 %v253, %v338
        %v364 = vsub.f32 %v254, %v342
        %v365 = vsub.f32 %v255, %v346
        %v366 = vsub.f32 %v256, %v350
        %v367 = vmul.f32 %v359, 1.442695
        %v368 = vpow.pop %v367
        %v369 = vmul.f32 %v360, 1.442695
        %v370 = vpow.pop %v369
        %v371 = vmul.f32 %v361, 1.442695
        %v372 = vpow.pop %v371
        %v373 = vmul.f32 %v362, 1.442695
        %v374 = vpow.pop %v373
        %v375 = vmul.f32 %v363, 1.442695
        %v376 = vpow.pop %v375
        %v377 = vmul.f32 %v364, 1.442695
        %v378 = vpow.pop %v377
        %v379 = vmul.f32 %v365, 1.442695
        %v380 = vpow.pop %v379
        %v381 = vmul.f32 %v366, 1.442695
        %v382 = vpow.pop %v381
        %391 = vset.pattern.permute.xlu0 0
        %392 = vperm.xlu0 %391, %v368
        %v393 = vpop.permute.xlu0 %392
        %394 = vset.pattern.permute.xlu0 0
        %395 = vperm.xlu0 %394, %v370
        %v396 = vpop.permute.xlu0 %395
        %397 = vset.pattern.permute.xlu0 0
        %398 = vperm.xlu0 %397, %v372
        %v399 = vpop.permute.xlu0 %398
        %400 = vset.pattern.permute.xlu0 0
        %401 = vperm.xlu0 %400, %v374
        %v402 = vpop.permute.xlu0 %401
        %403 = vset.pattern.permute.xlu0 0
        %404 = vperm.xlu0 %403, %v376
        %v405 = vpop.permute.xlu0 %404
        %406 = vset.pattern.permute.xlu0 0
        %407 = vperm.xlu0 %406, %v378
        %v408 = vpop.permute.xlu0 %407
        %409 = vset.pattern.permute.xlu0 0
        %410 = vperm.xlu0 %409, %v380
        %v411 = vpop.permute.xlu0 %410
        %412 = vset.pattern.permute.xlu0 0
        %413 = vperm.xlu0 %412, %v382
        %v414 = vpop.permute.xlu0 %413
        %v415 = vlaneseq
        %v416 = vshrl.u32 %v415, 7
        %v417 = vsub.s32 %v266, %v416
        %v418 = vrot.slane %v393, %v417
        %v419 = vlaneseq
        %v420 = vshrl.u32 %v419, 7
        %v421 = vsub.s32 %v266, %v420
        %v422 = vrot.slane %v396, %v421
        %v423 = vlaneseq
        %v424 = vshrl.u32 %v423, 7
        %v425 = vsub.s32 %v266, %v424
        %v426 = vrot.slane %v399, %v425
        %v427 = vlaneseq
        %v428 = vshrl.u32 %v427, 7
        %v429 = vsub.s32 %v266, %v428
        %v430 = vrot.slane %v402, %v429
        %v431 = vlaneseq
        %v432 = vshrl.u32 %v431, 7
        %v433 = vsub.s32 %v266, %v432
        %v434 = vrot.slane %v405, %v433
        %v435 = vlaneseq
        %v436 = vshrl.u32 %v435, 7
        %v437 = vsub.s32 %v266, %v436
        %v438 = vrot.slane %v408, %v437
        %v439 = vlaneseq
        %v440 = vshrl.u32 %v439, 7
        %v441 = vsub.s32 %v266, %v440
        %v442 = vrot.slane %v411, %v441
        %v443 = vlaneseq
        %v444 = vshrl.u32 %v443, 7
        %v445 = vsub.s32 %v266, %v444
        %v446 = vrot.slane %v414, %v445
        %v447 = vsel %vm299, %v422, %v418
        %v448 = vsel %vm301, %v426, %v447
        %v449 = vsel %vm303, %v430, %v448
        %v450 = vsel %vm305, %v434, %v449
        %v451 = vsel %vm307, %v438, %v450
        %v452 = vsel %vm309, %v442, %v451
        %v453 = vsel %vm311, %v446, %v452
        %v455 = vsel %vm314, %v453, 0.0
        %456 = vadd.xlane.f32.xlu0 %v455
        %v457 = vpop.xlane.xlu0 %456
        %v458 = vrcp.pop %v457
        %v460 = vlaneseq
        %v461 = vshrl.u32 %v460, 7
        %v462 = vsub.s32 0, %v461
        %v463 = vrot.slane %v458, %v462
        %v464 = vlaneseq
        %v465 = vshrl.u32 %v464, 7
        %v466 = vsub.s32 1, %v465
        %v467 = vrot.slane %v458, %v466
        %v468 = vlaneseq
        %v469 = vshrl.u32 %v468, 7
        %v470 = vsub.s32 2, %v469
        %v471 = vrot.slane %v458, %v470
        %v472 = vlaneseq
        %v473 = vshrl.u32 %v472, 7
        %v474 = vsub.s32 3, %v473
        %v475 = vrot.slane %v458, %v474
        %v476 = vlaneseq
        %v477 = vshrl.u32 %v476, 7
        %v478 = vsub.s32 4, %v477
        %v479 = vrot.slane %v458, %v478
        %v480 = vlaneseq
        %v481 = vshrl.u32 %v480, 7
        %v482 = vsub.s32 5, %v481
        %v483 = vrot.slane %v458, %v482
        %v484 = vlaneseq
        %v485 = vshrl.u32 %v484, 7
        %v486 = vsub.s32 6, %v485
        %v487 = vrot.slane %v458, %v486
        %v488 = vlaneseq
        %v489 = vshrl.u32 %v488, 7
        %v490 = vsub.s32 7, %v489
        %v491 = vrot.slane %v458, %v490
        %v500 = vmul.f32 %v368, %v463
        %v501 = vmul.f32 %v370, %v467
        %v502 = vmul.f32 %v372, %v471
        %v503 = vmul.f32 %v374, %v475
        %v504 = vmul.f32 %v376, %v479
        %v505 = vmul.f32 %v378, %v483
        %v506 = vmul.f32 %v380, %v487
        %v507 = vmul.f32 %v382, %v491
        %509 = vset.pattern.permute.xlu0 0
        %510 = vperm.xlu0 %509, %v500
        %v511 = vpop.permute.xlu0 %510
        %514 = vset.pattern.permute.xlu0 0
        %515 = vperm.xlu0 %514, %v501
        %v516 = vpop.permute.xlu0 %515
        %519 = vset.pattern.permute.xlu0 0
        %520 = vperm.xlu0 %519, %v502
        %v521 = vpop.permute.xlu0 %520
        %524 = vset.pattern.permute.xlu0 0
        %525 = vperm.xlu0 %524, %v503
        %v526 = vpop.permute.xlu0 %525
        %529 = vset.pattern.permute.xlu0 0
        %530 = vperm.xlu0 %529, %v504
        %v531 = vpop.permute.xlu0 %530
        %534 = vset.pattern.permute.xlu0 0
        %535 = vperm.xlu0 %534, %v505
        %v536 = vpop.permute.xlu0 %535
        %539 = vset.pattern.permute.xlu0 0
        %540 = vperm.xlu0 %539, %v506
        %v541 = vpop.permute.xlu0 %540
        %544 = vset.pattern.permute.xlu0 0
        %545 = vperm.xlu0 %544, %v507
        %v546 = vpop.permute.xlu0 %545
        %v548 = vmul.f32 %v201, %v511
        %v549 = vmul.f32 %v202, %v516
        %v550 = vmul.f32 %v203, %v521
        %v551 = vmul.f32 %v204, %v526
        %v552 = vmul.f32 %v205, %v531
        %v553 = vmul.f32 %v206, %v536
        %v554 = vmul.f32 %v207, %v541
        %v555 = vmul.f32 %v208, %v546
        %v556 = vsel %vm224, %v548, 0.0
        %v557 = vrot.slane %v556, 4
        %v558 = vadd.f32 %v556, %v557
        %v559 = vrot.slane %v558, 2
        %v560 = vadd.f32 %v558, %v559
        %v561 = vrot.slane %v560, 1
        %v562 = vadd.f32 %v560, %v561
        %v563 = vsel %vm224, %v549, 0.0
        %v564 = vrot.slane %v563, 4
        %v565 = vadd.f32 %v563, %v564
        %v566 = vrot.slane %v565, 2
        %v567 = vadd.f32 %v565, %v566
        %v568 = vrot.slane %v567, 1
        %v569 = vadd.f32 %v567, %v568
        %v570 = vsel %vm224, %v550, 0.0
        %v571 = vrot.slane %v570, 4
        %v572 = vadd.f32 %v570, %v571
        %v573 = vrot.slane %v572, 2
        %v574 = vadd.f32 %v572, %v573
        %v575 = vrot.slane %v574, 1
        %v576 = vadd.f32 %v574, %v575
        %v577 = vsel %vm224, %v551, 0.0
        %v578 = vrot.slane %v577, 4
        %v579 = vadd.f32 %v577, %v578
        %v580 = vrot.slane %v579, 2
        %v581 = vadd.f32 %v579, %v580
        %v582 = vrot.slane %v581, 1
        %v583 = vadd.f32 %v581, %v582
        %v584 = vsel %vm224, %v552, 0.0
        %v585 = vrot.slane %v584, 4
        %v586 = vadd.f32 %v584, %v585
        %v587 = vrot.slane %v586, 2
        %v588 = vadd.f32 %v586, %v587
        %v589 = vrot.slane %v588, 1
        %v590 = vadd.f32 %v588, %v589
        %v591 = vsel %vm224, %v553, 0.0
        %v592 = vrot.slane %v591, 4
        %v593 = vadd.f32 %v591, %v592
        %v594 = vrot.slane %v593, 2
        %v595 = vadd.f32 %v593, %v594
        %v596 = vrot.slane %v595, 1
        %v597 = vadd.f32 %v595, %v596
        %v598 = vsel %vm224, %v554, 0.0
        %v599 = vrot.slane %v598, 4
        %v600 = vadd.f32 %v598, %v599
        %v601 = vrot.slane %v600, 2
        %v602 = vadd.f32 %v600, %v601
        %v603 = vrot.slane %v602, 1
        %v604 = vadd.f32 %v602, %v603
        %v605 = vsel %vm224, %v555, 0.0
        %v606 = vrot.slane %v605, 4
        %v607 = vadd.f32 %v605, %v606
        %v608 = vrot.slane %v607, 2
        %v609 = vadd.f32 %v607, %v608
        %v610 = vrot.slane %v609, 1
        %v611 = vadd.f32 %v609, %v610
        %v620 = vsel %vm299, %v569, %v562
        %v621 = vsel %vm301, %v576, %v620
        %v622 = vsel %vm303, %v583, %v621
        %v623 = vsel %vm305, %v590, %v622
        %v624 = vsel %vm307, %v597, %v623
        %v625 = vsel %vm309, %v604, %v624
        %v626 = vsel %vm311, %v611, %v625
        %628 = vst.msk [vmem:[%s189] sm:$0xff] %vm224, %v626
        %v629 = vlaneseq
        %v630 = vshrl.u32 %v629, 7
        %v631 = vsub.s32 %v266, %v630
        %v632 = vrot.slane %v511, %v631
        %v633 = vlaneseq
        %v634 = vshrl.u32 %v633, 7
        %v635 = vsub.s32 %v266, %v634
        %v636 = vrot.slane %v516, %v635
        %v637 = vlaneseq
        %v638 = vshrl.u32 %v637, 7
        %v639 = vsub.s32 %v266, %v638
        %v640 = vrot.slane %v521, %v639
        %v641 = vlaneseq
        %v642 = vshrl.u32 %v641, 7
        %v643 = vsub.s32 %v266, %v642
        %v644 = vrot.slane %v526, %v643
        %v645 = vlaneseq
        %v646 = vshrl.u32 %v645, 7
        %v647 = vsub.s32 %v266, %v646
        %v648 = vrot.slane %v531, %v647
        %v649 = vlaneseq
        %v650 = vshrl.u32 %v649, 7
        %v651 = vsub.s32 %v266, %v650
        %v652 = vrot.slane %v536, %v651
        %v653 = vlaneseq
        %v654 = vshrl.u32 %v653, 7
        %v655 = vsub.s32 %v266, %v654
        %v656 = vrot.slane %v541, %v655
        %v657 = vlaneseq
        %v658 = vshrl.u32 %v657, 7
        %v659 = vsub.s32 %v266, %v658
        %v660 = vrot.slane %v546, %v659
        %v661 = vsel %vm299, %v636, %v632
        %v662 = vsel %vm301, %v640, %v661
        %v663 = vsel %vm303, %v644, %v662
        %v664 = vsel %vm305, %v648, %v663
        %v665 = vsel %vm307, %v652, %v664
        %v666 = vsel %vm309, %v656, %v665
        %v667 = vsel %vm311, %v660, %v666
        %669 = vst.msk [vmem:[%s200] sm:$0xff] %vm314, %v667
        %s670 = sand.u32 %s76, 1
        %s671 = scalar_lea.sflag [#allocation4], %s670
        %s672 = sand.u32 %s76, 1
        %s673 = smul.addr %s672, 8
        %s674 = scalar_lea.vmem [#allocation5], %s673
        %p675 = scmp.lt.s32.totalorder %s21, 1
        %s676 = scalar_select %p675, %s21, 1
        %s677 = smul.addr %s676, 8
        %s678 = scalar_lea.vmem %s3, %s677
        // Predicated region
        $region33: #{tpu_custom_call.1} parent=27 // pred_check
          %p679 = pneg %p86
        $region34: #{tpu_custom_call.1} parent=27 // pred_check_branch
          %681 = sbr.rel (%p679) target = $region36
        $region35: #{tpu_custom_call.1} parent=27 // pred_region
          %s683 = ssub.s32 128, 128
          %684 = vsyncadd %s671, %s683
          %s685 = smul.addr %s21, 128
          %s686 = scalar_lea.hbm %s2, %s685
          %s688 = sshll.u32 %s674, 4
          %s689 = int_to_ptr.vmem [resolvable:$true] %s688
          %691 = dma.vmem_to_hbm [thread:$0]  %s689, 128, %s686, %s671
        $region36: #{tpu_custom_call.1} parent=27 // pred_fallthru
          _
        // Predicated region
        $region37: #{tpu_custom_call.1} parent=27 // pred_check
          %p692 = pneg %p112
        $region38: #{tpu_custom_call.1} parent=27 // pred_check_branch
          %694 = sbr.rel (%p692) target = $region40
        $region39: #{tpu_custom_call.1} parent=27 // pred_region
          _
        $region40: #{tpu_custom_call.1} parent=27 // pred_fallthru
          _
      $region28: #{tpu_custom_call.1} parent=5 // pred_fallthru
        _
      %p695 = scmp.le.s32.totalorder 2, %s16
      // Predicated region
      $region41: #{tpu_custom_call.1} parent=5 // pred_check
        %p696 = pneg %p695
      $region42: #{tpu_custom_call.1} parent=5 // pred_check_branch
        %698 = sbr.rel (%p696) target = $region44
      $region43: #{tpu_custom_call.1} parent=5 // pred_region
        %s699 = ssub.s32 %s16, 2
        // Predicated region
        $region45: #{tpu_custom_call.1} parent=43 // pred_check
          %p700 = pneg %p92
        $region46: #{tpu_custom_call.1} parent=43 // pred_check_branch
          %702 = sbr.rel (%p700) target = $region48
        $region47: #{tpu_custom_call.1} parent=43 // pred_region
          %s703 = sand.u32 %s77, 1
          %s704 = scalar_lea.sflag [#allocation4], %s703
          %s705 = sand.u32 %s77, 1
          %s706 = smul.addr %s705, 8
          %s707 = scalar_lea.vmem [#allocation5], %s706
          %708 = dma.done %s704, 128
        $region48: #{tpu_custom_call.1} parent=43 // pred_fallthru
          _
        // Predicated region
        $region49: #{tpu_custom_call.1} parent=43 // pred_check
          %p709 = pneg %p118
        $region50: #{tpu_custom_call.1} parent=43 // pred_check_branch
          %711 = sbr.rel (%p709) target = $region52
        $region51: #{tpu_custom_call.1} parent=43 // pred_region
          %p712 = scmp.lt.s32.totalorder %s22, 1
          %s713 = scalar_select %p712, %s22, 1
          %s714 = smul.addr %s713, 8
          %s715 = scalar_lea.vmem %s3, %s714
        $region52: #{tpu_custom_call.1} parent=43 // pred_fallthru
          _
      $region44: #{tpu_custom_call.1} parent=5 // pred_fallthru
        _
    $region6: #{tpu_custom_call.1} parent=1 // loop_footer
      %s20 = sadd.s32 1, %s16
    $region7: #{tpu_custom_call.1} parent=1 // loop_footer_branch
      %15 = sbr.rel target = $region3
    $region8: #{tpu_custom_call.1} parent=1 // loop_exit
      _
    %716 = vsyncpa [#allocation3], 1
    %s717 = scalar_lea.sflag [#allocation3], 1
    %718 = vsyncpa %s717, 1
    %719 = vsyncpa [#allocation4], 1
    %s720 = scalar_lea.sflag [#allocation4], 1
    %721 = vsyncpa %s720, 1

</llo_original>
